<compile_context>
chip_gen: v6e
topology: v6e:2x2x1
jax: 0.10.0
libtpu: 0.0.40
codegen_flags: <defaults>
</compile_context>

<pallas_src>
import jax
import jax.numpy as jnp
from jax.experimental import pallas as pl
from jax.experimental.pallas import tpu as pltpu


def _round_up(v, m):
    return (v + m - 1) // m * m


# Problems whose whole working set is below this take the single-block path.
_SMALL_PATH_BYTES = 2 * 1024 * 1024


# ----------------------------------------------------------------------------
# Kernels
# ----------------------------------------------------------------------------
def _qpl_small_kernel(x_ref, w_ref, b_ref, o_ref):
    """Whole problem in one VMEM block: y = x @ W^T + bias."""
    o_ref[...] = (
        jnp.dot(x_ref[...], w_ref[...], preferred_element_type=jnp.float32)
        + b_ref[...]
    ).astype(o_ref.dtype)


def _qpl_tiled_kernel(x_ref, w_ref, b_ref, o_ref):
    """One (tm, tn) output tile; K is the trailing (arbitrary) grid axis.

    The output block index (i, j) is constant over k, so o_ref stays resident
    in VMEM across the reduction and doubles as the f32 accumulator.
    """
    k = pl.program_id(2)
    partial = jnp.dot(x_ref[...], w_ref[...], preferred_element_type=jnp.float32)

    @pl.when(k == 0)
    def _():
        o_ref[...] = partial + b_ref[...]          # bias fused into the init

    @pl.when(k > 0)
    def _():
        o_ref[...] += partial


# ----------------------------------------------------------------------------
# Wrapper
# ----------------------------------------------------------------------------
def quasipoly_layer_forward(x, w_t, bias, *, tm=1024, tn=1024, tk=512,
                            use_bf16=False):
    """QuasiPolyLayer forward (power == 1.0 specialization).

    x    : (N, in_features) float32
    w_t  : (in_features, out_features) float32   (W transposed once at init)
    bias : (out_features,) float32
    use_bf16 : cast x / W tiles to bf16 before the MXU (f32 accumulation kept);
               ~2-4x MXU throughput and half the DMA traffic, at ~1e-3 rel err.
    returns (N, out_features) float32
    """
    n, k_in = x.shape
    k_w, f = w_t.shape
    assert k_in == k_w and bias.shape == (f,)

    in_dtype = jnp.bfloat16 if use_bf16 else jnp.float32
    x = x.astype(in_dtype)
    w_t = w_t.astype(in_dtype)
    b2d = bias.astype(jnp.float32).reshape(1, f)

    footprint = 4 * (n * k_in + k_in * f + n * f + f)

    # ---- small-shape fast path: one block, full-extent specs, no padding ----
    if footprint <= _SMALL_PATH_BYTES:
        return pl.pallas_call(
            _qpl_small_kernel,
            out_shape=jax.ShapeDtypeStruct((n, f), jnp.float32),
            in_specs=[
                pl.BlockSpec(memory_space=pltpu.MemorySpace.VMEM),
                pl.BlockSpec(memory_space=pltpu.MemorySpace.VMEM),
                pl.BlockSpec(memory_space=pltpu.MemorySpace.VMEM),
            ],
            out_specs=pl.BlockSpec(memory_space=pltpu.MemorySpace.VMEM),
            cost_estimate=pl.CostEstimate(
                flops=2 * n * k_in * f + n * f,
                transcendentals=0,
                bytes_accessed=footprint,
            ),
        )(x, w_t, b2d)

    # ---- tiled MXU path ------------------------------------------------------
    # Tile clamps: sublane axis multiple of 8, lane axes multiples of 128.
    tm = min(tm, _round_up(n, 8))
    tk = min(tk, _round_up(k_in, 128))
    tn = min(tn, _round_up(f, 128))

    mp = _round_up(n, tm)
    kp = _round_up(k_in, tk)
    fp = _round_up(f, tn)

    # Pad only when the logical dims are not already tile-aligned.
    # (Zero rows/cols contribute nothing to the matmul; the bias-initialized
    #  padded rows/cols are sliced off below.)
    if (mp, kp) != (n, k_in):
        x_p = jnp.zeros((mp, kp), in_dtype).at[:n, :k_in].set(x)
    else:
        x_p = x
    if (kp, fp) != (k_in, f):
        # TODO(synk): for a real layer, hoist this one-off weight pad to init.
        w_p = jnp.zeros((kp, fp), in_dtype).at[:k_in, :f].set(w_t)
    else:
        w_p = w_t
    if fp != f:
        b_p = jnp.zeros((1, fp), jnp.float32).at[:, :f].set(b2d)
    else:
        b_p = b2d

    grid = (mp // tm, fp // tn, kp // tk)

    out_p = pl.pallas_call(
        _qpl_tiled_kernel,
        out_shape=jax.ShapeDtypeStruct((mp, fp), jnp.float32),
        grid_spec=pltpu.PrefetchScalarGridSpec(
            num_scalar_prefetch=0,
            grid=grid,
            in_specs=[
                pl.BlockSpec((tm, tk), lambda i, j, k: (i, k)),   # x tile
                pl.BlockSpec((tk, tn), lambda i, j, k: (k, j)),   # W^T tile
                pl.BlockSpec((1, tn), lambda i, j, k: (0, j)),    # bias tile
            ],
            # Same (i, j) for every k -> output block is the resident accumulator.
            out_specs=pl.BlockSpec((tm, tn), lambda i, j, k: (i, j)),
        ),
        compiler_params=pltpu.CompilerParams(
            dimension_semantics=("parallel", "parallel", "arbitrary"),
            vmem_limit_bytes=64 * 1024 * 1024,
        ),
        cost_estimate=pl.CostEstimate(
            flops=2 * mp * kp * fp + mp * fp,
            transcendentals=0,
            # Count K-loop re-streaming of x and W (tile re-reads), plus bias
            # and the single output writeback.
            bytes_accessed=4 * (mp * kp * (fp // tn)
                                + kp * fp * (mp // tm)
                                + fp + mp * fp),
        ),
    )(x_p, w_p, b_p)

    if (mp, fp) != (n, f):
        out_p = out_p[:n, :f]
    return out_p


# ----------------------------------------------------------------------------
# Parameter init mirroring QuasiPolyLayer.__init__ (power == 1.0)
# ----------------------------------------------------------------------------
def init_params(key, in_features, out_features):
    k_bb, k_tw, k_b = jax.random.split(key, 3)
    # bias_before: declared by the PyTorch module but unused in forward().
    bias_before = jax.random.normal(k_bb, (in_features,), jnp.float32)
    # synapses[i][j].term_weights ~ randn(3); power == 1.0 => only index 0 used.
    term_weights = jax.random.normal(
        k_tw, (out_features, in_features, 3), jnp.float32
    )
    bias = jax.random.normal(k_b, (out_features,), jnp.float32)

    w = term_weights[:, :, 0]       # (out_features, in_features)
    w_t = jnp.transpose(w)          # one-time init-side transpose
    return w_t, bias, bias_before


def reference_forward(x, w_t, bias):
    """Pure-JAX reference of the PyTorch forward (power == 1.0)."""
    return (
        jnp.dot(x.astype(jnp.float32), w_t.astype(jnp.float32),
                precision=jax.lax.Precision.HIGHEST)
        + bias.astype(jnp.float32)
    )


if __name__ == "__main__":
    key = jax.random.PRNGKey(0)
    k_x1, k_p1, k_x2, k_p2 = jax.random.split(key, 4)

    # --- Test 1: module's natural demo sizes -> small-shape fast path -------
    batch, in_features, out_features = 8, 4, 3
    x1 = jax.random.normal(k_x1, (batch, in_features), jnp.float32)
    w_t1, bias1, _bias_before1 = init_params(k_p1, in_features, out_features)

    out1 = jax.block_until_ready(quasipoly_layer_forward(x1, w_t1, bias1))
    ref1 = reference_forward(x1, w_t1, bias1)
    assert out1.shape == (batch, out_features)
    assert jnp.allclose(out1, ref1, atol=1e-4, rtol=1e-4)

    # --- Test 2: larger shapes -> tiled path (K accumulation + padding) -----
    n2, k2, f2 = 1040, 1280, 768
    x2 = jax.random.normal(k_x2, (n2, k2), jnp.float32)
    w_t2, bias2, _bias_before2 = init_params(k_p2, k2, f2)

    out2 = jax.block_until_ready(quasipoly_layer_forward(x2, w_t2, bias2))
    ref2 = reference_forward(x2, w_t2, bias2)
    assert out2.shape == (n2, f2)
    assert jnp.allclose(out2, ref2, atol=1e-2, rtol=1e-3)

    print("KERNEL_OK")
</pallas_src>

<mosaic_0001>
module attributes {stable_mosaic.version = 11 : i64} {
  func.func @_qpl_small_kernel(%arg0: memref<8x4xf32, #tpu.memory_space<vmem>>, %arg1: memref<4x3xf32, #tpu.memory_space<vmem>>, %arg2: memref<1x3xf32, #tpu.memory_space<vmem>>, %arg3: memref<8x3xf32, #tpu.memory_space<vmem>>) attributes {dimension_semantics = [], scalar_prefetch = 0 : i64, scratch_operands = 0 : i64, tpu.core_type = #tpu.core_type<tc>} {
    %c0 = arith.constant 0 : index
    %c0_0 = arith.constant 0 : index
    %0 = vector.load %arg0[%c0, %c0_0] : memref<8x4xf32, #tpu.memory_space<vmem>>, vector<8x4xf32>
    %c0_1 = arith.constant 0 : index
    %c0_2 = arith.constant 0 : index
    %1 = vector.load %arg1[%c0_1, %c0_2] : memref<4x3xf32, #tpu.memory_space<vmem>>, vector<4x3xf32>
    %cst = arith.constant dense<0.000000e+00> : vector<8x3xf32>
    %2 = tpu.matmul %0, %1, %cst {dimension_numbers = #tpu.dot_dimension_numbers<[1], [0], [0], [1], [0, 0, 1, 1], [], []>} : vector<8x4xf32>, vector<4x3xf32>, vector<8x3xf32> -> vector<8x3xf32>
    %c0_3 = arith.constant 0 : index
    %c0_4 = arith.constant 0 : index
    %3 = vector.load %arg2[%c0_3, %c0_4] : memref<1x3xf32, #tpu.memory_space<vmem>>, vector<1x3xf32>
    %4 = vector.broadcast %3 : vector<1x3xf32> to vector<8x3xf32>
    %5 = arith.addf %2, %4 : vector<8x3xf32>
    %c0_5 = arith.constant 0 : index
    %c0_6 = arith.constant 0 : index
    %6 = vector.load %arg3[%c0_5, %c0_6] : memref<8x3xf32, #tpu.memory_space<vmem>>, vector<8x3xf32>
    tpu.vector_store %arg3[%c0_5, %c0_6], %5 {strides = array<i32>} : memref<8x3xf32, #tpu.memory_space<vmem>>, vector<8x3xf32>,
    return
  }
}

</mosaic_0001>

<llo_original>
// kernel: tpu_custom_call.1
$region0: #{tpu_custom_call.1}
  #allocation0 [shape = 'u32[]', space=smem, size = 0x4, offset = 0x4, fixed_abs, tag = 'smem constant byte address 0x4 - core index']
  #allocation1 [shape = 'u32[144,128]{1,0:T(1,128)}', space=vmem, size = 0x12000, scoped, tag = 'internal scratch']
  %s0 = inlined_call_operand.vmem [shape: f32[8,4], index: 0, kind: input, shape index: {}]
  %s1 = inlined_call_operand.vmem [shape: f32[4,3], index: 1, kind: input, shape index: {}]
  %s2 = inlined_call_operand.vmem [shape: f32[1,3], index: 2, kind: input, shape index: {}]
  %s3 = inlined_call_operand.vmem [shape: f32[8,3], index: 3, kind: output, shape index: {}]
  %s4 = sld [smem:[#allocation0]]
  $region22: #{tpu_custom_call.1} parent=0
    _
  %s6 = ssub.s32 1, %s4
  %s7 = scalar_select 0, %s6, %s4
  // Predicated region
  $region2: #{tpu_custom_call.1} parent=0 // pred_check
    _
  $region3: #{tpu_custom_call.1} parent=0 // pred_check_branch
    %9 = sbr.rel (0) target = $region5
  $region4: #{tpu_custom_call.1} parent=0 // pred_region
    _
  $region5: #{tpu_custom_call.1} parent=0 // pred_fallthru
    _
  // Predicated region
  $region6: #{tpu_custom_call.1} parent=0 // pred_check
    _
  $region7: #{tpu_custom_call.1} parent=0 // pred_check_branch
    %11 = sbr.rel (0) target = $region9
  $region8: #{tpu_custom_call.1} parent=0 // pred_region
    _
  $region9: #{tpu_custom_call.1} parent=0 // pred_fallthru
    _
  // Predicated region
  $region10: #{tpu_custom_call.1} parent=0 // pred_check
    _
  $region11: #{tpu_custom_call.1} parent=0 // pred_check_branch
    %13 = sbr.rel (0) target = $region13
  $region12: #{tpu_custom_call.1} parent=0 // pred_region
    _
  $region13: #{tpu_custom_call.1} parent=0 // pred_fallthru
    _
  %v14 = vld [vmem:[%s0] sm:$0xff]
  %v15 = vld [vmem:[%s1] sm:$0xf]
  %v16 = vld [vmem:[%s2] sm:$0x1]
  %v18 = vlaneseq
  %v19 = vshrl.u32 %v18, 7
  %v20 = vsub.s32 0, %v19
  %v21 = vrot.slane %v16, %v20
  %vm23 = vcmask 31744
  %v25 = vsel %vm23, %v14, 0
  %vm27 = vcmask 1043456
  %v29 = vsel %vm27, %v15, 0
  %31 = vmatprep.subr.mxu0 0.0
  %32 = vmatpush1.msra.mxu0 0.0
  %33 = vmatprep.subr.mxu0 0.0
  %34 = vmatpush1.msra.mxu0 0.0
  %35 = vmatprep.subr.mxu0 0.0
  %36 = vmatpush1.msra.mxu0 0.0
  %37 = vmatprep.subr.mxu0 0.0
  %38 = vmatpush1.msra.mxu0 0.0
  %39 = vmatprep.subr.mxu0 0.0
  %40 = vmatpush1.msra.mxu0 0.0
  %41 = vmatprep.subr.mxu0 0.0
  %42 = vmatpush1.msra.mxu0 0.0
  %43 = vmatprep.subr.mxu0 0.0
  %44 = vmatpush1.msra.mxu0 0.0
  %45 = vmatprep.subr.mxu0 0.0
  %46 = vmatpush1.msra.mxu0 0.0
  %47 = vmatprep.subr.mxu0 0.0
  %48 = vmatpush1.msra.mxu0 0.0
  %49 = vmatprep.subr.mxu0 0.0
  %50 = vmatpush1.msra.mxu0 0.0
  %51 = vmatprep.subr.mxu0 0.0
  %52 = vmatpush1.msra.mxu0 0.0
  %53 = vmatprep.subr.mxu0 0.0
  %54 = vmatpush1.msra.mxu0 0.0
  %55 = vmatprep.subr.mxu0 0.0
  %56 = vmatpush1.msra.mxu0 0.0
  %57 = vmatprep.subr.mxu0 0.0
  %58 = vmatpush1.msra.mxu0 0.0
  %59 = vmatprep.subr.mxu0 0.0
  %60 = vmatpush1.msra.mxu0 0.0
  %61 = vmatprep.subr.mxu0 0.0
  %62 = vmatpush1.msra.mxu0 %v29
  %63 = vmatprep.subr.mxu0 0.0
  %64 = vmatpush2.msra.mxu0 0.0
  %65 = vmatprep.subr.mxu0 0.0
  %66 = vmatpush2.msra.mxu0 0.0
  %67 = vmatprep.subr.mxu0 0.0
  %68 = vmatpush2.msra.mxu0 0.0
  %69 = vmatprep.subr.mxu0 0.0
  %70 = vmatpush2.msra.mxu0 0.0
  %71 = vmatprep.subr.mxu0 0.0
  %72 = vmatpush2.msra.mxu0 0.0
  %73 = vmatprep.subr.mxu0 0.0
  %74 = vmatpush2.msra.mxu0 0.0
  %75 = vmatprep.subr.mxu0 0.0
  %76 = vmatpush2.msra.mxu0 0.0
  %77 = vmatprep.subr.mxu0 0.0
  %78 = vmatpush2.msra.mxu0 0.0
  %79 = vmatprep.subr.mxu0 0.0
  %80 = vmatpush2.msra.mxu0 0.0
  %81 = vmatprep.subr.mxu0 0.0
  %82 = vmatpush2.msra.mxu0 0.0
  %83 = vmatprep.subr.mxu0 0.0
  %84 = vmatpush2.msra.mxu0 0.0
  %85 = vmatprep.subr.mxu0 0.0
  %86 = vmatpush2.msra.mxu0 0.0
  %87 = vmatprep.subr.mxu0 0.0
  %88 = vmatpush2.msra.mxu0 0.0
  %89 = vmatprep.subr.mxu0 0.0
  %90 = vmatpush2.msra.mxu0 0.0
  %91 = vmatprep.subr.mxu0 0.0
  %92 = vmatpush2.msra.mxu0 0.0
  %93 = vmatprep.subr.mxu0 0.0
  %94 = vmatpush2.msra.mxu0 0.0
  %95 = vmatprep.mubr.f32.mxu0 0.0
  %96 = vmatmul.mubr.f32.gmra.mxu0 %v25
  %v97 = vpop.f32.mrf.mxu0
  %v98 = vadd.f32 %v21, %v97
  %v99 = vpop.f32.mrf.mxu0
  %100 = vdwg.mxu0
  %vm101 = vcmask 23552
  %102 = vst.msk [vmem:[%s3] sm:$0xff] %vm101, %v98
  // Predicated region
  $region14: #{tpu_custom_call.1} parent=0 // pred_check
    _
  $region15: #{tpu_custom_call.1} parent=0 // pred_check_branch
    %104 = sbr.rel (0) target = $region17
  $region16: #{tpu_custom_call.1} parent=0 // pred_region
    _
  $region17: #{tpu_custom_call.1} parent=0 // pred_fallthru
    _
  // Predicated region
  $region18: #{tpu_custom_call.1} parent=0 // pred_check
    _
  $region19: #{tpu_custom_call.1} parent=0 // pred_check_branch
    %106 = sbr.rel (0) target = $region21
  $region20: #{tpu_custom_call.1} parent=0 // pred_region
    _
  $region21: #{tpu_custom_call.1} parent=0 // pred_fallthru
    _

</llo_original>
